<compile_context>
chip_gen: v7x
topology: tpu7x:2x2x1
jax: 0.10.0
libtpu: 0.0.40
codegen_flags: <defaults>
</compile_context>

<pallas_src>
import jax
import jax.numpy as jnp
from jax.experimental import pallas as pl
from jax.experimental.pallas import tpu as pltpu


def _round_up(n, m):
    return ((n + m - 1) // m) * m


def net_kernel(w2_ref, b2_ref, xT_ref, oT_ref):
    """Compute oT = w2.T @ xT + b2 (i.e. fc2(x), transposed, lane-dense).

    xT_ref: [F_in, TB] f32 in VMEM  -- batch on the lane axis.
    w2_ref: [F_in, F_out] f32 in SMEM (scalar reads).
    b2_ref: [1, F_out]   f32 in SMEM (scalar reads).
    oT_ref: [F_out, TB]  f32 in VMEM.
    """
    f_in, f_out = w2_ref.shape
    x = xT_ref[...]                                   # [F_in, TB]
    # Fully unrolled: f_in * f_out = 12 scalar*vector mul-adds on the VPU.
    for j in range(f_out):
        acc = x[0:1, :] * w2_ref[0, j] + b2_ref[0, j]  # bias folded in once
        for k in range(1, f_in):
            acc = acc + x[k:k + 1, :] * w2_ref[k, j]
        oT_ref[j:j + 1, :] = acc                       # full-lane store


def net_forward(x, w1, b1, w2, b2, *, tb=1024):
    """Forward pass of Net.

    x : [B, 4] f32, w2: [4, 3] (fc2.weight.T), b2: [1, 3]  ->  [B, 3].
    w1/b1 are accepted for interface parity with the module but are dead in
    the reference forward, so they are never shipped to the kernel.
    """
    del w1, b1  # dead in the PyTorch forward (h is overwritten by fc2(x))

    B, f_in = x.shape
    f_out = w2.shape[1]
    b2 = b2.reshape(1, f_out).astype(jnp.float32)
    w2 = w2.astype(jnp.float32)

    # Lane-dense layout: batch on the lane axis, padded to a multiple of the
    # lane tile (itself a multiple of 128).
    tb_eff = min(tb, _round_up(B, 128))
    B_pad = _round_up(B, tb_eff)
    xT = jnp.zeros((f_in, B_pad), jnp.float32).at[:, :B].set(
        x.astype(jnp.float32).T)

    grid = (B_pad // tb_eff,)
    outT = pl.pallas_call(
        net_kernel,
        out_shape=jax.ShapeDtypeStruct((f_out, B_pad), jnp.float32),
        grid=grid,
        in_specs=[
            pl.BlockSpec(memory_space=pltpu.MemorySpace.SMEM),    # w2 [4,3]
            pl.BlockSpec(memory_space=pltpu.MemorySpace.SMEM),    # b2 [1,3]
            pl.BlockSpec((f_in, tb_eff), lambda i: (0, i)),       # xT tile
        ],
        out_specs=pl.BlockSpec((f_out, tb_eff), lambda i: (0, i)),
        compiler_params=pltpu.CompilerParams(
            dimension_semantics=("parallel",),   # shards across TCs on v7x
            vmem_limit_bytes=32 * 1024 * 1024,   # well under v7x's 64 MiB
        ),
    )(w2, b2, xT)

    return outT[:, :B].T                          # back to [B, 3]


def init_params(key):
    """Deterministic init matching nn.Linear shapes (uniform +-1/sqrt(fan_in)).

    Weights are returned already transposed to [in, out].  fc1's parameters
    are generated for module parity but are dead in the reference forward.
    """
    k1, k2, k3, k4 = jax.random.split(key, 4)
    bound = 1.0 / jnp.sqrt(4.0)
    w1 = jax.random.uniform(k1, (4, 4), jnp.float32, -bound, bound)   # fc1.weight.T (unused)
    b1 = jax.random.uniform(k2, (1, 4), jnp.float32, -bound, bound)   # fc1.bias     (unused)
    w2 = jax.random.uniform(k3, (4, 3), jnp.float32, -bound, bound)   # fc2.weight.T
    b2 = jax.random.uniform(k4, (1, 3), jnp.float32, -bound, bound)   # fc2.bias
    return w1, b1, w2, b2


if __name__ == "__main__":
    key = jax.random.PRNGKey(0)
    k_x, k_p = jax.random.split(key)

    B = 8  # iris-like batch; feature dim = 4 (sepal/petal measurements)
    x = jax.random.normal(k_x, (B, 4), jnp.float32)
    w1, b1, w2, b2 = init_params(k_p)

    out = net_forward(x, w1, b1, w2, b2)
    out = jax.block_until_ready(out)

    # Reference check in plain JAX (same semantics as the PyTorch forward:
    # only fc2(x) is returned).
    ref = x @ w2 + b2
    assert out.shape == (B, 3)
    assert jnp.allclose(out, ref, atol=1e-5), "mismatch vs reference"

    print("KERNEL_OK")
</pallas_src>

<mosaic_0001>
module attributes {stable_mosaic.version = 11 : i64} {
  func.func @net_kernel(%arg0: i32, %arg1: memref<4x3xf32, #tpu.memory_space<smem>>, %arg2: memref<1x3xf32, #tpu.memory_space<smem>>, %arg3: memref<4x128xf32, #tpu.memory_space<vmem>>, %arg4: memref<3x128xf32, #tpu.memory_space<vmem>>) attributes {dimension_semantics = [#tpu.dimension_semantics<parallel>], iteration_bounds = array<i64: 1>, scalar_prefetch = 0 : i64, scratch_operands = 0 : i64, tpu.core_type = #tpu.core_type<tc>, window_params = [{transform_indices = @transform_0, window_bounds = array<i64: 4, 3>}, {transform_indices = @transform_1, window_bounds = array<i64: 1, 3>}, {transform_indices = @transform_2, window_bounds = array<i64: 4, 128>}, {transform_indices = @transform_3, window_bounds = array<i64: 3, 128>}]} {
    %c0 = arith.constant 0 : index
    %c0_0 = arith.constant 0 : index
    %0 = vector.load %arg3[%c0, %c0_0] : memref<4x128xf32, #tpu.memory_space<vmem>>, vector<4x128xf32>
    %1 = vector.extract_strided_slice %0 {offsets = [0, 0], sizes = [1, 128], strides = [1, 1]} : vector<4x128xf32> to vector<1x128xf32>
    %c0_1 = arith.constant 0 : index
    %c0_2 = arith.constant 0 : index
    %2 = memref.load %arg1[%c0_1, %c0_2] : memref<4x3xf32, #tpu.memory_space<smem>>
    %3 = vector.broadcast %2 : f32 to vector<1x128xf32>
    %4 = arith.mulf %1, %3 : vector<1x128xf32>
    %c0_3 = arith.constant 0 : index
    %c0_4 = arith.constant 0 : index
    %5 = memref.load %arg2[%c0_3, %c0_4] : memref<1x3xf32, #tpu.memory_space<smem>>
    %6 = vector.broadcast %5 : f32 to vector<1x128xf32>
    %7 = arith.addf %4, %6 : vector<1x128xf32>
    %8 = vector.extract_strided_slice %0 {offsets = [1, 0], sizes = [1, 128], strides = [1, 1]} : vector<4x128xf32> to vector<1x128xf32>
    %c1 = arith.constant 1 : index
    %c0_5 = arith.constant 0 : index
    %9 = memref.load %arg1[%c1, %c0_5] : memref<4x3xf32, #tpu.memory_space<smem>>
    %10 = vector.broadcast %9 : f32 to vector<1x128xf32>
    %11 = arith.mulf %8, %10 : vector<1x128xf32>
    %12 = arith.addf %7, %11 : vector<1x128xf32>
    %13 = vector.extract_strided_slice %0 {offsets = [2, 0], sizes = [1, 128], strides = [1, 1]} : vector<4x128xf32> to vector<1x128xf32>
    %c2 = arith.constant 2 : index
    %c0_6 = arith.constant 0 : index
    %14 = memref.load %arg1[%c2, %c0_6] : memref<4x3xf32, #tpu.memory_space<smem>>
    %15 = vector.broadcast %14 : f32 to vector<1x128xf32>
    %16 = arith.mulf %13, %15 : vector<1x128xf32>
    %17 = arith.addf %12, %16 : vector<1x128xf32>
    %18 = vector.extract_strided_slice %0 {offsets = [3, 0], sizes = [1, 128], strides = [1, 1]} : vector<4x128xf32> to vector<1x128xf32>
    %c3 = arith.constant 3 : index
    %c0_7 = arith.constant 0 : index
    %19 = memref.load %arg1[%c3, %c0_7] : memref<4x3xf32, #tpu.memory_space<smem>>
    %20 = vector.broadcast %19 : f32 to vector<1x128xf32>
    %21 = arith.mulf %18, %20 : vector<1x128xf32>
    %22 = arith.addf %17, %21 : vector<1x128xf32>
    %c0_8 = arith.constant 0 : index
    %c0_9 = arith.constant 0 : index
    %23 = vector.load %arg4[%c0_8, %c0_9] : memref<3x128xf32, #tpu.memory_space<vmem>>, vector<1x128xf32>
    tpu.vector_store %arg4[%c0_8, %c0_9], %22 {strides = array<i32>} : memref<3x128xf32, #tpu.memory_space<vmem>>, vector<1x128xf32>,
    %24 = vector.extract_strided_slice %0 {offsets = [0, 0], sizes = [1, 128], strides = [1, 1]} : vector<4x128xf32> to vector<1x128xf32>
    %c0_10 = arith.constant 0 : index
    %c1_11 = arith.constant 1 : index
    %25 = memref.load %arg1[%c0_10, %c1_11] : memref<4x3xf32, #tpu.memory_space<smem>>
    %26 = vector.broadcast %25 : f32 to vector<1x128xf32>
    %27 = arith.mulf %24, %26 : vector<1x128xf32>
    %c0_12 = arith.constant 0 : index
    %c1_13 = arith.constant 1 : index
    %28 = memref.load %arg2[%c0_12, %c1_13] : memref<1x3xf32, #tpu.memory_space<smem>>
    %29 = vector.broadcast %28 : f32 to vector<1x128xf32>
    %30 = arith.addf %27, %29 : vector<1x128xf32>
    %31 = vector.extract_strided_slice %0 {offsets = [1, 0], sizes = [1, 128], strides = [1, 1]} : vector<4x128xf32> to vector<1x128xf32>
    %c1_14 = arith.constant 1 : index
    %c1_15 = arith.constant 1 : index
    %32 = memref.load %arg1[%c1_14, %c1_15] : memref<4x3xf32, #tpu.memory_space<smem>>
    %33 = vector.broadcast %32 : f32 to vector<1x128xf32>
    %34 = arith.mulf %31, %33 : vector<1x128xf32>
    %35 = arith.addf %30, %34 : vector<1x128xf32>
    %36 = vector.extract_strided_slice %0 {offsets = [2, 0], sizes = [1, 128], strides = [1, 1]} : vector<4x128xf32> to vector<1x128xf32>
    %c2_16 = arith.constant 2 : index
    %c1_17 = arith.constant 1 : index
    %37 = memref.load %arg1[%c2_16, %c1_17] : memref<4x3xf32, #tpu.memory_space<smem>>
    %38 = vector.broadcast %37 : f32 to vector<1x128xf32>
    %39 = arith.mulf %36, %38 : vector<1x128xf32>
    %40 = arith.addf %35, %39 : vector<1x128xf32>
    %41 = vector.extract_strided_slice %0 {offsets = [3, 0], sizes = [1, 128], strides = [1, 1]} : vector<4x128xf32> to vector<1x128xf32>
    %c3_18 = arith.constant 3 : index
    %c1_19 = arith.constant 1 : index
    %42 = memref.load %arg1[%c3_18, %c1_19] : memref<4x3xf32, #tpu.memory_space<smem>>
    %43 = vector.broadcast %42 : f32 to vector<1x128xf32>
    %44 = arith.mulf %41, %43 : vector<1x128xf32>
    %45 = arith.addf %40, %44 : vector<1x128xf32>
    %c1_20 = arith.constant 1 : index
    %c0_21 = arith.constant 0 : index
    %46 = vector.load %arg4[%c1_20, %c0_21] : memref<3x128xf32, #tpu.memory_space<vmem>>, vector<1x128xf32>
    tpu.vector_store %arg4[%c1_20, %c0_21], %45 {strides = array<i32>} : memref<3x128xf32, #tpu.memory_space<vmem>>, vector<1x128xf32>,
    %47 = vector.extract_strided_slice %0 {offsets = [0, 0], sizes = [1, 128], strides = [1, 1]} : vector<4x128xf32> to vector<1x128xf32>
    %c0_22 = arith.constant 0 : index
    %c2_23 = arith.constant 2 : index
    %48 = memref.load %arg1[%c0_22, %c2_23] : memref<4x3xf32, #tpu.memory_space<smem>>
    %49 = vector.broadcast %48 : f32 to vector<1x128xf32>
    %50 = arith.mulf %47, %49 : vector<1x128xf32>
    %c0_24 = arith.constant 0 : index
    %c2_25 = arith.constant 2 : index
    %51 = memref.load %arg2[%c0_24, %c2_25] : memref<1x3xf32, #tpu.memory_space<smem>>
    %52 = vector.broadcast %51 : f32 to vector<1x128xf32>
    %53 = arith.addf %50, %52 : vector<1x128xf32>
    %54 = vector.extract_strided_slice %0 {offsets = [1, 0], sizes = [1, 128], strides = [1, 1]} : vector<4x128xf32> to vector<1x128xf32>
    %c1_26 = arith.constant 1 : index
    %c2_27 = arith.constant 2 : index
    %55 = memref.load %arg1[%c1_26, %c2_27] : memref<4x3xf32, #tpu.memory_space<smem>>
    %56 = vector.broadcast %55 : f32 to vector<1x128xf32>
    %57 = arith.mulf %54, %56 : vector<1x128xf32>
    %58 = arith.addf %53, %57 : vector<1x128xf32>
    %59 = vector.extract_strided_slice %0 {offsets = [2, 0], sizes = [1, 128], strides = [1, 1]} : vector<4x128xf32> to vector<1x128xf32>
    %c2_28 = arith.constant 2 : index
    %c2_29 = arith.constant 2 : index
    %60 = memref.load %arg1[%c2_28, %c2_29] : memref<4x3xf32, #tpu.memory_space<smem>>
    %61 = vector.broadcast %60 : f32 to vector<1x128xf32>
    %62 = arith.mulf %59, %61 : vector<1x128xf32>
    %63 = arith.addf %58, %62 : vector<1x128xf32>
    %64 = vector.extract_strided_slice %0 {offsets = [3, 0], sizes = [1, 128], strides = [1, 1]} : vector<4x128xf32> to vector<1x128xf32>
    %c3_30 = arith.constant 3 : index
    %c2_31 = arith.constant 2 : index
    %65 = memref.load %arg1[%c3_30, %c2_31] : memref<4x3xf32, #tpu.memory_space<smem>>
    %66 = vector.broadcast %65 : f32 to vector<1x128xf32>
    %67 = arith.mulf %64, %66 : vector<1x128xf32>
    %68 = arith.addf %63, %67 : vector<1x128xf32>
    %c2_32 = arith.constant 2 : index
    %c0_33 = arith.constant 0 : index
    %69 = vector.load %arg4[%c2_32, %c0_33] : memref<3x128xf32, #tpu.memory_space<vmem>>, vector<1x128xf32>
    tpu.vector_store %arg4[%c2_32, %c0_33], %68 {strides = array<i32>} : memref<3x128xf32, #tpu.memory_space<vmem>>, vector<1x128xf32>,
    return
  }
  func.func @transform_0(%arg0: i32) -> (i32, i32) {
    %c0_i32 = arith.constant 0 : i32
    %c0_i32_0 = arith.constant 0 : i32
    %c0_i32_1 = arith.constant 0 : i32
    return %c0_i32, %c0_i32_0 : i32, i32
  }
  func.func @transform_1(%arg0: i32) -> (i32, i32) {
    %c0_i32 = arith.constant 0 : i32
    %c0_i32_0 = arith.constant 0 : i32
    %c0_i32_1 = arith.constant 0 : i32
    return %c0_i32, %c0_i32_0 : i32, i32
  }
  func.func @transform_2(%arg0: i32) -> (i32, i32) {
    %c0_i32 = arith.constant 0 : i32
    %c0_i32_0 = arith.constant 0 : i32
    return %c0_i32, %arg0 : i32, i32
  }
  func.func @transform_3(%arg0: i32) -> (i32, i32) {
    %c0_i32 = arith.constant 0 : i32
    %c0_i32_0 = arith.constant 0 : i32
    return %c0_i32, %arg0 : i32, i32
  }
}

</mosaic_0001>

<llo_original>
// kernel: tpu_custom_call.1
$region0: #{tpu_custom_call.1}
  #allocation0 [shape = 'u32[]', space=smem, size = 0x4, offset = 0x4, fixed_abs, tag = 'smem constant byte address 0x4 - core index']
  #allocation1 [shape = 'u32[144,128]{1,0:T(1,128)}', space=vmem, size = 0x12000, scoped, tag = 'internal scratch']
  %s0 = inlined_call_operand.hbm [shape: f32[4,3], index: 0, kind: input, shape index: {}]
  %s1 = inlined_call_operand.vmem [shape: f32[1,3], index: 1, kind: input, shape index: {}]
  %s2 = inlined_call_operand.vmem [shape: f32[4,128], index: 2, kind: input, shape index: {}]
  %s3 = inlined_call_operand.hbm [shape: f32[3,128], index: 3, kind: output, shape index: {}]
  %s4 = sld [smem:[#allocation0]]
  $region30: #{tpu_custom_call.1} parent=0
    _
  %s6 = ssub.s32 1, %s4
  %s7 = scalar_select 0, %s6, %s4
  $region1: #{tpu_custom_call.1} parent=0
    #allocation2 [shape = 'u8[2048]{0}', space=smem, size = 0x800, scoped, tag = 'input window, operand 0, single buffered']
    #allocation3 [shape = 's32[1]{0}', space=sflag, size = 0x4, scoped, tag = 'scoped memory for tpu_custom_call.1']
    #allocation4 [shape = 's32[1]{0}', space=sflag, size = 0x4, scoped, tag = 'scoped memory for tpu_custom_call.1']
    #allocation5 [shape = 's32[1]{0}', space=sflag, size = 0x4, scoped, tag = 'scoped memory for tpu_custom_call.1']
    #allocation6 [shape = 'u8[512]{0}', space=smem, size = 0x200, scoped, tag = 'input window, operand 1, single buffered']
    #allocation7 [shape = 'u8[2048]{0}', space=vmem, size = 0x800, scoped, tag = 'output window, operand 0, single buffered']
    %8 = vsyncpa [#allocation4], 0
    %9 = vsyncpa [#allocation5], 0
    %10 = vsyncpa [#allocation3], 0
    // Predicated region
    $region2: #{tpu_custom_call.1} parent=1 // pred_check
      _
    $region3: #{tpu_custom_call.1} parent=1 // pred_check_branch
      %12 = sbr.rel (0) target = $region5
    $region4: #{tpu_custom_call.1} parent=1 // pred_region
      %s14 = ssub.s32 64, 64
      %15 = vsyncadd [#allocation4], %s14
      %18 = dma.hbm_to_smem %s0, 64, [#allocation2], [#allocation4]
    $region5: #{tpu_custom_call.1} parent=1 // pred_fallthru
      _
    // Predicated region
    $region6: #{tpu_custom_call.1} parent=1 // pred_check
      _
    $region7: #{tpu_custom_call.1} parent=1 // pred_check_branch
      %20 = sbr.rel (0) target = $region9
    $region8: #{tpu_custom_call.1} parent=1 // pred_region
      %s22 = ssub.s32 16, 16
      %23 = vsyncadd [#allocation5], %s22
      %s25 = sshll.u32 %s1, 4
      %s26 = int_to_ptr.vmem [resolvable:$true] %s25
      %28 = dma.vmem_to_smem %s26, 16, [#allocation6], [#allocation5]
    $region9: #{tpu_custom_call.1} parent=1 // pred_fallthru
      _
    // Predicated region
    $region10: #{tpu_custom_call.1} parent=1 // pred_check
      _
    $region11: #{tpu_custom_call.1} parent=1 // pred_check_branch
      %30 = sbr.rel (0) target = $region13
    $region12: #{tpu_custom_call.1} parent=1 // pred_region
      _
    $region13: #{tpu_custom_call.1} parent=1 // pred_fallthru
      _
    // Predicated region
    $region14: #{tpu_custom_call.1} parent=1 // pred_check
      _
    $region15: #{tpu_custom_call.1} parent=1 // pred_check_branch
      %32 = sbr.rel (0) target = $region17
    $region16: #{tpu_custom_call.1} parent=1 // pred_region
      %33 = dma.done [#allocation4], 64
    $region17: #{tpu_custom_call.1} parent=1 // pred_fallthru
      _
    // Predicated region
    $region18: #{tpu_custom_call.1} parent=1 // pred_check
      _
    $region19: #{tpu_custom_call.1} parent=1 // pred_check_branch
      %35 = sbr.rel (0) target = $region21
    $region20: #{tpu_custom_call.1} parent=1 // pred_region
      %36 = dma.done [#allocation5], 16
    $region21: #{tpu_custom_call.1} parent=1 // pred_fallthru
      _
    %37 = sfence
    %v38 = vld [vmem:[%s2] sm:$0xf]
    %s39 = sld [smem:[#allocation2]]
    %v40 = vstv %s39
    %v41 = vmul.f32 %v38, %v40
    %s42 = sld [smem:[#allocation6]]
    %v43 = vstv %s42
    %v44 = vadd.f32 %v41, %v43
    %s45 = sld [smem:[#allocation2 + $0x80]]
    %v46 = vstv %s45
    %v47 = vmul.f32 %v38, %v46
    %v49 = vrot.slane %v47, 1
    %v51 = vadd.f32 %v44, %v49
    %s52 = sld [smem:[#allocation2 + $0x100]]
    %v53 = vstv %s52
    %v54 = vmul.f32 %v38, %v53
    %v56 = vrot.slane %v54, 2
    %v58 = vadd.f32 %v51, %v56
    %s59 = sld [smem:[#allocation2 + $0x180]]
    %v60 = vstv %s59
    %v61 = vmul.f32 %v38, %v60
    %v63 = vrot.slane %v61, 3
    %v65 = vadd.f32 %v58, %v63
    %66 = vst [vmem:[#allocation7] sm:$0x1] %v65
    %s67 = sld [smem:[#allocation2 + $0x1]]
    %v68 = vstv %s67
    %v69 = vmul.f32 %v38, %v68
    %s70 = sld [smem:[#allocation6 + $0x1]]
    %v71 = vstv %s70
    %v72 = vadd.f32 %v69, %v71
    %s73 = sld [smem:[#allocation2 + $0x81]]
    %v74 = vstv %s73
    %v75 = vmul.f32 %v38, %v74
    %v77 = vrot.slane %v75, 1
    %v79 = vadd.f32 %v72, %v77
    %s80 = sld [smem:[#allocation2 + $0x101]]
    %v81 = vstv %s80
    %v82 = vmul.f32 %v38, %v81
    %v84 = vrot.slane %v82, 2
    %v86 = vadd.f32 %v79, %v84
    %s87 = sld [smem:[#allocation2 + $0x181]]
    %v88 = vstv %s87
    %v89 = vmul.f32 %v38, %v88
    %v91 = vrot.slane %v89, 3
    %v93 = vadd.f32 %v86, %v91
    %94 = vst [vmem:[#allocation7 + $0x1] sm:$0x1] %v93
    %s95 = sld [smem:[#allocation2 + $0x2]]
    %v96 = vstv %s95
    %v97 = vmul.f32 %v38, %v96
    %s98 = sld [smem:[#allocation6 + $0x2]]
    %v99 = vstv %s98
    %v100 = vadd.f32 %v97, %v99
    %s101 = sld [smem:[#allocation2 + $0x82]]
    %v102 = vstv %s101
    %v103 = vmul.f32 %v38, %v102
    %v105 = vrot.slane %v103, 1
    %v107 = vadd.f32 %v100, %v105
    %s108 = sld [smem:[#allocation2 + $0x102]]
    %v109 = vstv %s108
    %v110 = vmul.f32 %v38, %v109
    %v112 = vrot.slane %v110, 2
    %v114 = vadd.f32 %v107, %v112
    %s115 = sld [smem:[#allocation2 + $0x182]]
    %v116 = vstv %s115
    %v117 = vmul.f32 %v38, %v116
    %v119 = vrot.slane %v117, 3
    %v121 = vadd.f32 %v114, %v119
    %122 = vst [vmem:[#allocation7 + $0x2] sm:$0x1] %v121
    // Predicated region
    $region22: #{tpu_custom_call.1} parent=1 // pred_check
      _
    $region23: #{tpu_custom_call.1} parent=1 // pred_check_branch
      %124 = sbr.rel (0) target = $region25
    $region24: #{tpu_custom_call.1} parent=1 // pred_region
      %s126 = ssub.s32 64, 64
      %127 = vsyncadd [#allocation3], %s126
      %s129 = sshll.u32 [#allocation7], 4
      %s130 = int_to_ptr.vmem [resolvable:$true] %s129
      %132 = dma.vmem_to_hbm [thread:$0]  %s130, 64, %s3, [#allocation3]
    $region25: #{tpu_custom_call.1} parent=1 // pred_fallthru
      _
    // Predicated region
    $region26: #{tpu_custom_call.1} parent=1 // pred_check
      _
    $region27: #{tpu_custom_call.1} parent=1 // pred_check_branch
      %134 = sbr.rel (0) target = $region29
    $region28: #{tpu_custom_call.1} parent=1 // pred_region
      %135 = dma.done [#allocation3], 64
    $region29: #{tpu_custom_call.1} parent=1 // pred_fallthru
      _
    %136 = vsyncpa [#allocation3], 1
    %137 = vsyncpa [#allocation4], 1
    %138 = vsyncpa [#allocation5], 1

</llo_original>
